<compile_context>
chip_gen: v5e
topology: v5e:2x2
jax: 0.10.0
libtpu: 0.0.40
codegen_flags: <defaults>
</compile_context>

<pallas_src>
import jax
import jax.numpy as jnp
from jax.experimental import pallas as pl
from jax.experimental.pallas import tpu as pltpu


def _round_up(v, m):
    return (v + m - 1) // m * m


def visual_decoder_kernel(x_ref, w1_ref, b1_ref, w2_ref, b2_ref, o_ref):
    # fc1: (TM, L) @ (L, H1p), f32 accumulation on the MXU.  The x tile is cast
    # to the weight dtype (bf16 on the default path) so both MXU operands take
    # the fast path; x stays full precision in HBM.
    x = x_ref[...].astype(w1_ref.dtype)
    h = jnp.dot(x, w1_ref[...], preferred_element_type=jnp.float32)
    h = h + b1_ref[...].astype(jnp.float32)
    # fc2: (TM, H1p) @ (H1p, TN).  Narrow h to the weight dtype before the
    # second dot (keeps the fc2 intermediate bf16-wide on the default path).
    y = jnp.dot(h.astype(w2_ref.dtype), w2_ref[...],
                preferred_element_type=jnp.float32)
    y = y + b2_ref[...].astype(jnp.float32)
    o_ref[...] = y.astype(o_ref.dtype)


def visual_decoder(x, w1, b1, w2, b2, *, block_m=256, block_n=None,
                   compute_dtype=jnp.bfloat16, single_buffer_resident=True):
    """y = (x @ w1 + b1) @ w2 + b2   (VisualDecoder.forward).

    x:  (B, L)          activations (kept in their own dtype in HBM)
    w1: (L, H1)         = PyTorch vis_dec_fc1.weight.T
    b1: (H1,) / (1,H1)  = vis_dec_fc1.bias
    w2: (H1, D)         = PyTorch vis_dec_fc2.weight.T
    b2: (D,) / (1,D)    = vis_dec_fc2.bias
    compute_dtype: MXU operand dtype for the weights (and the in-kernel casts
      of the x tile / fc1 intermediate).  Default bf16; pass jnp.float32 for
      the exact path.  Accumulation and bias adds are always f32.
    """
    out_dtype = x.dtype
    B, L = x.shape
    H1 = w1.shape[1]
    D = w2.shape[1]

    b1 = b1.reshape(1, H1)
    b2 = b2.reshape(1, D)

    if compute_dtype is not None:
        w1 = w1.astype(compute_dtype)
        w2 = w2.astype(compute_dtype)
    # Biases are added in f32 (free on v6e/v7x; avoids bf16 VPU work on v5e).
    b1 = b1.astype(jnp.float32)
    b2 = b2.astype(jnp.float32)

    # ---- layout padding (all pads are zeros -> numerically exact) ----------
    # NOTE: the fc1 contraction dim L (=32 in the real model) is left unpadded
    # on purpose; fc1 is <2% of the FLOPs, padding K only adds HBM traffic.
    tm = max(8, min(_round_up(block_m, 8), _round_up(B, 8)))
    Bp = _round_up(B, tm)
    H1p = _round_up(H1, 128)
    if block_n is None:
        Dp = _round_up(D, 128)
        # Split the output columns in two when possible: keeps both v7x
        # TensorCores busy even when the batch grid has a single step and
        # halves the per-step W2 / out-tile VMEM footprint.
        tn = Dp // 2 if (Dp >= 256 and Dp % 256 == 0) else Dp
    else:
        tn = _round_up(block_n, 128)
        Dp = _round_up(D, tn)
    n_i = Bp // tm
    n_j = Dp // tn

    if Bp != B:
        x = jnp.pad(x, ((0, Bp - B), (0, 0)))
    if H1p != H1:
        w1 = jnp.pad(w1, ((0, 0), (0, H1p - H1)))
        b1 = jnp.pad(b1, ((0, 0), (0, H1p - H1)))
        w2 = jnp.pad(w2, ((0, H1p - H1), (0, 0)))
    if Dp != D:
        w2 = jnp.pad(w2, ((0, 0), (0, Dp - D)))
        b2 = jnp.pad(b2, ((0, 0), (0, Dp - D)))

    # ---- advisory cost estimate --------------------------------------------
    flops = 2 * Bp * (L * H1p * n_j + H1p * Dp)
    bytes_accessed = int(
        sum(int(a.size) * a.dtype.itemsize for a in (x, w1, b1, w2, b2))
        + Bp * Dp * jnp.dtype(out_dtype).itemsize)
    cost = pl.CostEstimate(flops=flops, transcendentals=0,
                           bytes_accessed=bytes_accessed)

    # ---- rough VMEM footprint -> scoped-VMEM limit (only if needed) --------
    res = 1 if single_buffer_resident else 2
    w_bytes = jnp.dtype(w1.dtype).itemsize
    est = (2 * tm * L * x.dtype.itemsize                              # x tile
           + res * (L * H1p * w_bytes + H1p * 4)                      # w1, b1
           + (res if n_j == 1 else 2) * (H1p * tn * w_bytes + tn * 4)  # w2, b2
           + 2 * tm * tn * jnp.dtype(out_dtype).itemsize              # out tile
           + tm * H1p * 4 + tm * tn * 4)                              # h / y scratch
    vmem_limit = None
    if est > 12 * 1024 * 1024:
        vmem_limit = min(max(32 * 1024 * 1024, int(est * 1.5)),
                         48 * 1024 * 1024)

    grid = (n_i, n_j)

    def _call(single_buffer):
        def _spec(shape, index_map, resident):
            if resident and single_buffer and hasattr(pl, "Buffered"):
                return pl.BlockSpec(shape, index_map,
                                    pipeline_mode=pl.Buffered(1))
            return pl.BlockSpec(shape, index_map)

        in_specs = [
            _spec((tm, L), lambda i, j: (i, 0), False),        # x streams over i
            _spec((L, H1p), lambda i, j: (0, 0), True),        # w1 resident
            _spec((1, H1p), lambda i, j: (0, 0), True),        # b1 resident
            _spec((H1p, tn), lambda i, j: (0, j), n_j == 1),   # w2 (resident iff single N tile)
            _spec((1, tn), lambda i, j: (0, j), n_j == 1),     # b2
        ]
        return pl.pallas_call(
            visual_decoder_kernel,
            out_shape=jax.ShapeDtypeStruct((Bp, Dp), out_dtype),
            grid=grid,
            in_specs=in_specs,
            out_specs=pl.BlockSpec((tm, tn), lambda i, j: (i, j)),
            compiler_params=pltpu.CompilerParams(
                dimension_semantics=("parallel", "parallel"),
                vmem_limit_bytes=vmem_limit,
            ),
            cost_estimate=cost,
        )(x, w1, b1, w2, b2)

    if single_buffer_resident:
        try:
            out = _call(True)
        except Exception:
            # Fallback if this jax build rejects Buffered(1) single-buffering.
            out = _call(False)
    else:
        out = _call(False)

    return out[:B, :D]


def init_params(key, latent_dim, dec_fc_img_1, decoded_img, dtype=jnp.float32):
    """Deterministic synthetic parameters (shapes match the module's nn.Linear)."""
    k1, k2, k3, k4 = jax.random.split(key, 4)
    # Stored as (in, out); equivalent to PyTorch weight.T
    w1 = jax.random.normal(k1, (latent_dim, dec_fc_img_1), dtype) * 0.05
    b1 = jax.random.normal(k2, (1, dec_fc_img_1), dtype) * 0.05
    w2 = jax.random.normal(k3, (dec_fc_img_1, decoded_img), dtype) * 0.05
    b2 = jax.random.normal(k4, (1, decoded_img), dtype) * 0.05
    return w1, b1, w2, b2


if __name__ == "__main__":
    # Small shapes consistent with VisualDecoder(latent_dim, dec_fc_img_1, enc_img_dim).
    # Real dims are 32 -> 1024 -> 2048; here 32 -> 64 -> 192 exercises the
    # H1 (64->128) and D (192->256) padding, the batch (2->8) padding, and the
    # two-tile "parallel" N grid axis.
    batch, latent_dim, dec_fc_img_1, decoded_img = 2, 32, 64, 192

    key = jax.random.PRNGKey(0)
    kx, kp = jax.random.split(key)
    x = jax.random.normal(kx, (batch, latent_dim), jnp.float32)
    w1, b1, w2, b2 = init_params(kp, latent_dim, dec_fc_img_1, decoded_img)

    # --- exact f32 path vs high-precision JAX reference ----------------------
    out_f32 = jax.block_until_ready(
        visual_decoder(x, w1, b1, w2, b2, compute_dtype=jnp.float32))
    hp = jax.lax.Precision.HIGHEST
    ref_f32 = jnp.dot(jnp.dot(x, w1, precision=hp) + b1, w2, precision=hp) + b2
    assert out_f32.shape == (batch, decoded_img)
    assert jnp.allclose(out_f32, ref_f32, atol=1e-3, rtol=1e-3), float(
        jnp.max(jnp.abs(out_f32 - ref_f32)))

    # --- default bf16-weight path vs matched-precision JAX reference ---------
    out_bf = jax.block_until_ready(visual_decoder(x, w1, b1, w2, b2))
    bf = jnp.bfloat16
    h_ref = jnp.dot(x.astype(bf), w1.astype(bf),
                    preferred_element_type=jnp.float32) + b1.astype(jnp.float32)
    ref_bf = jnp.dot(h_ref.astype(bf), w2.astype(bf),
                     preferred_element_type=jnp.float32) + b2.astype(jnp.float32)
    assert out_bf.shape == (batch, decoded_img)
    assert jnp.allclose(out_bf.astype(jnp.float32), ref_bf,
                        atol=2e-2, rtol=2e-2), float(
        jnp.max(jnp.abs(out_bf.astype(jnp.float32) - ref_bf)))
    # Sanity vs the full-precision reference (bf16 weights -> loose tolerance).
    assert jnp.allclose(out_bf.astype(jnp.float32), ref_f32, atol=1e-1, rtol=1e-1)

    print("KERNEL_OK")
</pallas_src>

<mosaic_0001>
module attributes {stable_mosaic.version = 11 : i64} {
  func.func @visual_decoder_kernel(%arg0: i32, %arg1: i32, %arg2: memref<8x32xf32, #tpu.memory_space<vmem>>, %arg3: memref<32x128xf32, #tpu.memory_space<vmem>>, %arg4: memref<1x128xf32, #tpu.memory_space<vmem>>, %arg5: memref<128x128xf32, #tpu.memory_space<vmem>>, %arg6: memref<1x128xf32, #tpu.memory_space<vmem>>, %arg7: memref<8x128xf32, #tpu.memory_space<vmem>>) attributes {dimension_semantics = [#tpu.dimension_semantics<parallel>, #tpu.dimension_semantics<parallel>], iteration_bounds = array<i64: 1, 2>, scalar_prefetch = 0 : i64, scratch_operands = 0 : i64, tpu.core_type = #tpu.core_type<tc>, window_params = [{transform_indices = @transform_0, window_bounds = array<i64: 8, 32>}, {pipeline_mode = #tpu.pipeline_mode<synchronous>, transform_indices = @transform_1, window_bounds = array<i64: 32, 128>}, {pipeline_mode = #tpu.pipeline_mode<synchronous>, transform_indices = @transform_2, window_bounds = array<i64: 1, 128>}, {transform_indices = @transform_3, window_bounds = array<i64: 128, 128>}, {transform_indices = @transform_4, window_bounds = array<i64: 1, 128>}, {transform_indices = @transform_5, window_bounds = array<i64: 8, 128>}]} {
    %c0 = arith.constant 0 : index
    %c0_0 = arith.constant 0 : index
    %0 = vector.load %arg2[%c0, %c0_0] : memref<8x32xf32, #tpu.memory_space<vmem>>, vector<8x32xf32>
    %c0_1 = arith.constant 0 : index
    %c0_2 = arith.constant 0 : index
    %1 = vector.load %arg3[%c0_1, %c0_2] : memref<32x128xf32, #tpu.memory_space<vmem>>, vector<32x128xf32>
    %cst = arith.constant dense<0.000000e+00> : vector<8x128xf32>
    %2 = tpu.matmul %0, %1, %cst {dimension_numbers = #tpu.dot_dimension_numbers<[1], [0], [0], [1], [0, 0, 1, 1], [], []>} : vector<8x32xf32>, vector<32x128xf32>, vector<8x128xf32> -> vector<8x128xf32>
    %c0_3 = arith.constant 0 : index
    %c0_4 = arith.constant 0 : index
    %3 = vector.load %arg4[%c0_3, %c0_4] : memref<1x128xf32, #tpu.memory_space<vmem>>, vector<1x128xf32>
    %4 = vector.broadcast %3 : vector<1x128xf32> to vector<8x128xf32>
    %5 = arith.addf %2, %4 : vector<8x128xf32>
    %c0_5 = arith.constant 0 : index
    %c0_6 = arith.constant 0 : index
    %6 = vector.load %arg5[%c0_5, %c0_6] : memref<128x128xf32, #tpu.memory_space<vmem>>, vector<128x128xf32>
    %cst_7 = arith.constant dense<0.000000e+00> : vector<8x128xf32>
    %7 = tpu.matmul %5, %6, %cst_7 {dimension_numbers = #tpu.dot_dimension_numbers<[1], [0], [0], [1], [0, 0, 1, 1], [], []>} : vector<8x128xf32>, vector<128x128xf32>, vector<8x128xf32> -> vector<8x128xf32>
    %c0_8 = arith.constant 0 : index
    %c0_9 = arith.constant 0 : index
    %8 = vector.load %arg6[%c0_8, %c0_9] : memref<1x128xf32, #tpu.memory_space<vmem>>, vector<1x128xf32>
    %9 = vector.broadcast %8 : vector<1x128xf32> to vector<8x128xf32>
    %10 = arith.addf %7, %9 : vector<8x128xf32>
    %c0_10 = arith.constant 0 : index
    %c0_11 = arith.constant 0 : index
    %11 = vector.load %arg7[%c0_10, %c0_11] : memref<8x128xf32, #tpu.memory_space<vmem>>, vector<8x128xf32>
    tpu.vector_store %arg7[%c0_10, %c0_11], %10 {strides = array<i32>} : memref<8x128xf32, #tpu.memory_space<vmem>>, vector<8x128xf32>,
    return
  }
  func.func @transform_0(%arg0: i32, %arg1: i32) -> (i32, i32) {
    %c0_i32 = arith.constant 0 : i32
    %c0_i32_0 = arith.constant 0 : i32
    return %arg0, %c0_i32 : i32, i32
  }
  func.func @transform_1(%arg0: i32, %arg1: i32) -> (i32, i32) {
    %c0_i32 = arith.constant 0 : i32
    %c0_i32_0 = arith.constant 0 : i32
    %c0_i32_1 = arith.constant 0 : i32
    return %c0_i32, %c0_i32_0 : i32, i32
  }
  func.func @transform_2(%arg0: i32, %arg1: i32) -> (i32, i32) {
    %c0_i32 = arith.constant 0 : i32
    %c0_i32_0 = arith.constant 0 : i32
    %c0_i32_1 = arith.constant 0 : i32
    return %c0_i32, %c0_i32_0 : i32, i32
  }
  func.func @transform_3(%arg0: i32, %arg1: i32) -> (i32, i32) {
    %c0_i32 = arith.constant 0 : i32
    %c0_i32_0 = arith.constant 0 : i32
    return %c0_i32, %arg1 : i32, i32
  }
  func.func @transform_4(%arg0: i32, %arg1: i32) -> (i32, i32) {
    %c0_i32 = arith.constant 0 : i32
    %c0_i32_0 = arith.constant 0 : i32
    return %c0_i32, %arg1 : i32, i32
  }
  func.func @transform_5(%arg0: i32, %arg1: i32) -> (i32, i32) {
    %c0_i32 = arith.constant 0 : i32
    return %arg0, %arg1 : i32, i32
  }
}

module attributes {stable_mosaic.version = 11 : i64} {
  func.func @visual_decoder_kernel(%arg0: i32, %arg1: i32, %arg2: memref<8x32xf32, #tpu.memory_space<vmem>>, %arg3: memref<32x128xf32, #tpu.memory_space<vmem>>, %arg4: memref<1x128xf32, #tpu.memory_space<vmem>>, %arg5: memref<128x128xf32, #tpu.memory_space<vmem>>, %arg6: memref<1x128xf32, #tpu.memory_space<vmem>>, %arg7: memref<8x128xf32, #tpu.memory_space<vmem>>) attributes {dimension_semantics = [#tpu.dimension_semantics<parallel>, #tpu.dimension_semantics<parallel>], iteration_bounds = array<i64: 1, 2>, scalar_prefetch = 0 : i64, scratch_operands = 0 : i64, tpu.core_type = #tpu.core_type<tc>, window_params = [{transform_indices = @transform_0, window_bounds = array<i64: 8, 32>}, {pipeline_mode = #tpu.pipeline_mode<synchronous>, transform_indices = @transform_1, window_bounds = array<i64: 32, 128>}, {pipeline_mode = #tpu.pipeline_mode<synchronous>, transform_indices = @transform_2, window_bounds = array<i64: 1, 128>}, {transform_indices = @transform_3, window_bounds = array<i64: 128, 128>}, {transform_indices = @transform_4, window_bounds = array<i64: 1, 128>}, {transform_indices = @transform_5, window_bounds = array<i64: 8, 128>}]} {
    %c0 = arith.constant 0 : index
    %c0_0 = arith.constant 0 : index
    %0 = vector.load %arg2[%c0, %c0_0] : memref<8x32xf32, #tpu.memory_space<vmem>>, vector<8x32xf32>
    %c0_1 = arith.constant 0 : index
    %c0_2 = arith.constant 0 : index
    %1 = vector.load %arg3[%c0_1, %c0_2] : memref<32x128xf32, #tpu.memory_space<vmem>>, vector<32x128xf32>
    %cst = arith.constant dense<0.000000e+00> : vector<8x128xf32>
    %2 = tpu.matmul %0, %1, %cst {dimension_numbers = #tpu.dot_dimension_numbers<[1], [0], [0], [1], [0, 0, 1, 1], [], []>} : vector<8x32xf32>, vector<32x128xf32>, vector<8x128xf32> -> vector<8x128xf32>
    %c0_3 = arith.constant 0 : index
    %c0_4 = arith.constant 0 : index
    %3 = vector.load %arg4[%c0_3, %c0_4] : memref<1x128xf32, #tpu.memory_space<vmem>>, vector<1x128xf32>
    %4 = vector.broadcast %3 : vector<1x128xf32> to vector<8x128xf32>
    %5 = arith.addf %2, %4 : vector<8x128xf32>
    %c0_5 = arith.constant 0 : index
    %c0_6 = arith.constant 0 : index
    %6 = vector.load %arg5[%c0_5, %c0_6] : memref<128x128xf32, #tpu.memory_space<vmem>>, vector<128x128xf32>
    %cst_7 = arith.constant dense<0.000000e+00> : vector<8x128xf32>
    %7 = tpu.matmul %5, %6, %cst_7 {dimension_numbers = #tpu.dot_dimension_numbers<[1], [0], [0], [1], [0, 0, 1, 1], [], []>} : vector<8x128xf32>, vector<128x128xf32>, vector<8x128xf32> -> vector<8x128xf32>
    %c0_8 = arith.constant 0 : index
    %c0_9 = arith.constant 0 : index
    %8 = vector.load %arg6[%c0_8, %c0_9] : memref<1x128xf32, #tpu.memory_space<vmem>>, vector<1x128xf32>
    %9 = vector.broadcast %8 : vector<1x128xf32> to vector<8x128xf32>
    %10 = arith.addf %7, %9 : vector<8x128xf32>
    %c0_10 = arith.constant 0 : index
    %c0_11 = arith.constant 0 : index
    %11 = vector.load %arg7[%c0_10, %c0_11] : memref<8x128xf32, #tpu.memory_space<vmem>>, vector<8x128xf32>
    tpu.vector_store %arg7[%c0_10, %c0_11], %10 {strides = array<i32>} : memref<8x128xf32, #tpu.memory_space<vmem>>, vector<8x128xf32>,
    return
  }
  func.func @transform_0(%arg0: i32, %arg1: i32) -> (i32, i32) {
    %c0_i32 = arith.constant 0 : i32
    %c0_i32_0 = arith.constant 0 : i32
    return %arg0, %c0_i32 : i32, i32
  }
  func.func @transform_1(%arg0: i32, %arg1: i32) -> (i32, i32) {
    %c0_i32 = arith.constant 0 : i32
    %c0_i32_0 = arith.constant 0 : i32
    %c0_i32_1 = arith.constant 0 : i32
    return %c0_i32, %c0_i32_0 : i32, i32
  }
  func.func @transform_2(%arg0: i32, %arg1: i32) -> (i32, i32) {
    %c0_i32 = arith.constant 0 : i32
    %c0_i32_0 = arith.constant 0 : i32
    %c0_i32_1 = arith.constant 0 : i32
    return %c0_i32, %c0_i32_0 : i32, i32
  }
  func.func @transform_3(%arg0: i32, %arg1: i32) -> (i32, i32) {
    %c0_i32 = arith.constant 0 : i32
    %c0_i32_0 = arith.constant 0 : i32
    return %c0_i32, %arg1 : i32, i32
  }
  func.func @transform_4(%arg0: i32, %arg1: i32) -> (i32, i32) {
    %c0_i32 = arith.constant 0 : i32
    %c0_i32_0 = arith.constant 0 : i32
    return %c0_i32, %arg1 : i32, i32
  }
  func.func @transform_5(%arg0: i32, %arg1: i32) -> (i32, i32) {
    %c0_i32 = arith.constant 0 : i32
    return %arg0, %arg1 : i32, i32
  }
}

</mosaic_0001>

<llo_original>
// kernel: tpu_custom_call.1
$region0: #{tpu_custom_call.1}
  #allocation0 [shape = 'u32[]', space=smem, size = 0x4, offset = 0x4, fixed_abs, tag = 'smem constant byte address 0x4 - core index']
  #allocation1 [shape = 'u32[72,128]{1,0:T(1,128)}', space=vmem, size = 0x9000, scoped, tag = 'internal scratch']
  %s0 = inlined_call_operand.hbm [shape: f32[8,32], index: 0, kind: input, shape index: {}]
  %s1 = inlined_call_operand.hbm [shape: f32[32,128], index: 1, kind: input, shape index: {}]
  %s2 = inlined_call_operand.vmem [shape: f32[1,128], index: 2, kind: input, shape index: {}]
  %s3 = inlined_call_operand.hbm [shape: f32[128,256], index: 3, kind: input, shape index: {}]
  %s4 = inlined_call_operand.vmem [shape: f32[1,256], index: 4, kind: input, shape index: {}]
  %s5 = inlined_call_operand.hbm [shape: f32[8,256], index: 5, kind: output, shape index: {}]
  %s6 = sld [smem:[#allocation0]]
  $region65: #{tpu_custom_call.1} parent=0
    _
  %s8 = ssub.s32 1, %s6
  %s9 = scalar_select 0, %s8, %s6
  $region1: #{tpu_custom_call.1} parent=0
    #allocation2 [shape = 'u8[4096]{0}', space=vmem, size = 0x1000, scoped, tag = 'input window, operand 0, single buffered']
    #allocation3 [shape = 's32[2]{0}', space=sflag, size = 0x8, scoped, tag = 'scoped memory for tpu_custom_call.1']
    #allocation4 [shape = 's32[2]{0}', space=sflag, size = 0x8, scoped, tag = 'scoped memory for tpu_custom_call.1']
    #allocation5 [shape = 'u8[16384]{0}', space=vmem, size = 0x4000, scoped, tag = 'input window, operand 1, single buffered']
    #allocation6 [shape = 's32[1]{0}', space=sflag, size = 0x4, scoped, tag = 'scoped memory for tpu_custom_call.1']
    #allocation7 [shape = 'u8[131072]{0}', space=vmem, size = 0x20000, scoped, tag = 'input window, operand 3']
    #allocation8 [shape = 'u8[8192]{0}', space=vmem, size = 0x2000, scoped, tag = 'output window, operand 0']
    %10 = vsyncpa [#allocation3], 0
    %11 = vsyncpa [#allocation6], 0
    %12 = vsyncpa [#allocation4], 0
    %s13 = scalar_lea.sflag [#allocation4], 1
    %14 = vsyncpa %s13, 0
    loop: start=0, step=1, limit=4
    $region2: #{tpu_custom_call.1} parent=1 // loop_pre_header
      _
    $region3: #{tpu_custom_call.1} parent=1 // loop_header
      %s16 = sphi 0, %s20
      %p17 = scmp.ge.s32.totalorder %s16, 4
      %s23 = sphi 0, %s35
      %s24 = sphi 0, %s31
      %s25 = sphi 0, %s23
      %s26 = sphi 0, %s24
      %s27 = sphi 0, %s25
      %s28 = sphi 0, %s26
      %s38 = sphi 0, %s40
      %s41 = sphi 0, %s38
      %s42 = sphi 0, %s41
      %s58 = sphi 0, %s42
      %s62 = sphi 0, %s62
      %s64 = sphi 0, %s62
      %s65 = sphi 0, %s64
      %s79 = sphi 0, %s65
      %s83 = sphi 0, %s83
      %s85 = sphi 0, %s83
      %s86 = sphi 0, %s85
      %s100 = sphi 0, %s86
      %s106 = sphi 0, %s108
      %s109 = sphi 0, %s106
      %s110 = sphi 0, %s109
      %s126 = sphi 0, %s110
      %s132 = sphi 0, %s134
      %s135 = sphi 0, %s132
      %s136 = sphi 0, %s135
      %s152 = sphi 0, %s136
      %s160 = sphi 0, %s162
      %s163 = sphi 0, %s160
      %s164 = sphi 0, %s163
      %s180 = sphi 0, %s164
    $region4: #{tpu_custom_call.1} parent=1 // loop_header_branch
      %19 = sbr.rel (%p17) target = $region8
    $region5: #{tpu_custom_call.1} parent=1 // loop_body
      %s21 = ssub.s32 %s16, 1
      %s22 = ssub.s32 %s16, 2
      %s29 = sadd.s32 1, %s24
      %p30 = scmp.ge.s32.totalorder %s29, 2
      %s31 = scalar_select %p30, 0, %s29
      %s32 = sadd.s32 1, %s23
      %s33 = scalar_select %p30, %s32, %s23
      %p34 = scmp.ge.s32.totalorder %s33, 1
      %s35 = scalar_select %p34, 0, %s33
      %s36 = ssub.s32 %s23, %s35
      %p37 = scmp.eq.s32.totalorder %s36, 0
      %s39 = sadd.s32 %s38, 1
      %s40 = scalar_select %p37, %s38, %s39
      %p43 = pneg %p37
      %p44 = scmp.eq.s32.totalorder %s16, 1
      %p45 = por %p43, %p44
      %p46 = scmp.ne.s32.totalorder %s38, %s41
      %p47 = scmp.eq.s32.totalorder %s16, 0
      %p48 = por %p46, %p47
      %p49 = scmp.ne.s32.totalorder %s38, %s41
      %p50 = scmp.eq.s32.totalorder %s21, 1
      %p51 = por %p49, %p50
      %p52 = scmp.ne.s32.totalorder %s41, %s42
      %p53 = scmp.eq.s32.totalorder %s21, 0
      %p54 = por %p52, %p53
      %p55 = scmp.ne.s32.totalorder %s41, %s42
      %p56 = scmp.eq.s32.totalorder %s22, 1
      %p57 = por %p55, %p56
      %p59 = scmp.ne.s32.totalorder %s42, %s58
      %p60 = scmp.eq.s32.totalorder %s22, 0
      %p61 = por %p59, %p60
      %s63 = sadd.s32 %s62, 1
      %p66 = scmp.eq.s32.totalorder %s16, 1
      %p67 = scmp.ne.s32.totalorder %s62, %s64
      %p68 = scmp.eq.s32.totalorder %s16, 0
      %p69 = por %p67, %p68
      %p70 = scmp.ne.s32.totalorder %s62, %s64
      %p71 = scmp.eq.s32.totalorder %s21, 1
      %p72 = por %p70, %p71
      %p73 = scmp.ne.s32.totalorder %s64, %s65
      %p74 = scmp.eq.s32.totalorder %s21, 0
      %p75 = por %p73, %p74
      %p76 = scmp.ne.s32.totalorder %s64, %s65
      %p77 = scmp.eq.s32.totalorder %s22, 1
      %p78 = por %p76, %p77
      %p80 = scmp.ne.s32.totalorder %s65, %s79
      %p81 = scmp.eq.s32.totalorder %s22, 0
      %p82 = por %p80, %p81
      %s84 = sadd.s32 %s83, 1
      %p87 = scmp.eq.s32.totalorder %s16, 1
      %p88 = scmp.ne.s32.totalorder %s83, %s85
      %p89 = scmp.eq.s32.totalorder %s16, 0
      %p90 = por %p88, %p89
      %p91 = scmp.ne.s32.totalorder %s83, %s85
      %p92 = scmp.eq.s32.totalorder %s21, 1
      %p93 = por %p91, %p92
      %p94 = scmp.ne.s32.totalorder %s85, %s86
      %p95 = scmp.eq.s32.totalorder %s21, 0
      %p96 = por %p94, %p95
      %p97 = scmp.ne.s32.totalorder %s85, %s86
      %p98 = scmp.eq.s32.totalorder %s22, 1
      %p99 = por %p97, %p98
      %p101 = scmp.ne.s32.totalorder %s86, %s100
      %p102 = scmp.eq.s32.totalorder %s22, 0
      %p103 = por %p101, %p102
      %s104 = ssub.s32 %s24, %s31
      %p105 = scmp.eq.s32.totalorder %s104, 0
      %s107 = sadd.s32 %s106, 1
      %s108 = scalar_select %p105, %s106, %s107
      %p111 = pneg %p105
      %p112 = scmp.eq.s32.totalorder %s16, 1
      %p113 = por %p111, %p112
      %p114 = scmp.ne.s32.totalorder %s106, %s109
      %p115 = scmp.eq.s32.totalorder %s16, 0
      %p116 = por %p114, %p115
      %p117 = scmp.ne.s32.totalorder %s106, %s109
      %p118 = scmp.eq.s32.totalorder %s21, 1
      %p119 = por %p117, %p118
      %p120 = scmp.ne.s32.totalorder %s109, %s110
      %p121 = scmp.eq.s32.totalorder %s21, 0
      %p122 = por %p120, %p121
      %p123 = scmp.ne.s32.totalorder %s109, %s110
      %p124 = scmp.eq.s32.totalorder %s22, 1
      %p125 = por %p123, %p124
      %p127 = scmp.ne.s32.totalorder %s110, %s126
      %p128 = scmp.eq.s32.totalorder %s22, 0
      %p129 = por %p127, %p128
      %s130 = ssub.s32 %s24, %s31
      %p131 = scmp.eq.s32.totalorder %s130, 0
      %s133 = sadd.s32 %s132, 1
      %s134 = scalar_select %p131, %s132, %s133
      %p137 = pneg %p131
      %p138 = scmp.eq.s32.totalorder %s16, 1
      %p139 = por %p137, %p138
      %p140 = scmp.ne.s32.totalorder %s132, %s135
      %p141 = scmp.eq.s32.totalorder %s16, 0
      %p142 = por %p140, %p141
      %p143 = scmp.ne.s32.totalorder %s132, %s135
      %p144 = scmp.eq.s32.totalorder %s21, 1
      %p145 = por %p143, %p144
      %p146 = scmp.ne.s32.totalorder %s135, %s136
      %p147 = scmp.eq.s32.totalorder %s21, 0
      %p148 = por %p146, %p147
      %p149 = scmp.ne.s32.totalorder %s135, %s136
      %p150 = scmp.eq.s32.totalorder %s22, 1
      %p151 = por %p149, %p150
      %p153 = scmp.ne.s32.totalorder %s136, %s152
      %p154 = scmp.eq.s32.totalorder %s22, 0
      %p155 = por %p153, %p154
      %s156 = ssub.s32 %s23, %s35
      %s157 = ssub.s32 %s24, %s31
      %s158 = sor.u32 %s156, %s157
      %p159 = scmp.eq.s32.totalorder %s158, 0
      %s161 = sadd.s32 %s160, 1
      %s162 = scalar_select %p159, %s160, %s161
      %p165 = pneg %p159
      %p166 = scmp.eq.s32.totalorder %s16, 1
      %p167 = por %p165, %p166
      %p168 = scmp.ne.s32.totalorder %s160, %s163
      %p169 = scmp.eq.s32.totalorder %s16, 0
      %p170 = por %p168, %p169
      %p171 = scmp.ne.s32.totalorder %s160, %s163
      %p172 = scmp.eq.s32.totalorder %s21, 1
      %p173 = por %p171, %p172
      %p174 = scmp.ne.s32.totalorder %s163, %s164
      %p175 = scmp.eq.s32.totalorder %s21, 0
      %p176 = por %p174, %p175
      %p177 = scmp.ne.s32.totalorder %s163, %s164
      %p178 = scmp.eq.s32.totalorder %s22, 1
      %p179 = por %p177, %p178
      %p181 = scmp.ne.s32.totalorder %s164, %s180
      %p182 = scmp.eq.s32.totalorder %s22, 0
      %p183 = por %p181, %p182
      %p184 = scmp.le.s32.totalorder 1, %s16
      %p185 = scmp.lt.s32.totalorder %s16, 3
      %p186 = pnand %p184, %p185
      %p187 = pneg %p186
      // Predicated region
      $region9: #{tpu_custom_call.1} parent=5 // pred_check
        _
      $region10: #{tpu_custom_call.1} parent=5 // pred_check_branch
        %189 = sbr.rel (%p186) target = $region12
      $region11: #{tpu_custom_call.1} parent=5 // pred_region
        %s190 = ssub.s32 %s16, 1
        // Predicated region
        $region13: #{tpu_custom_call.1} parent=11 // pred_check
          %p191 = pneg %p54
        $region14: #{tpu_custom_call.1} parent=11 // pred_check_branch
          %193 = sbr.rel (%p191) target = $region16
        $region15: #{tpu_custom_call.1} parent=11 // pred_region
          %195 = vsyncadd [#allocation3], 0
          %s196 = smul.addr %s25, 8
          %s197 = scalar_lea.hbm %s0, %s196
          %s199 = sshll.u32 %s197, 4
          %s200 = int_to_ptr.hbm [resolvable:$true] %s199
          %s201 = sshll.u32 [#allocation2], 4
          %s202 = int_to_ptr.vmem [resolvable:$true] %s201
          %204 = dma.hbm_to_vmem [thread:$0]  %s200, 128, %s202, [#allocation3]
        $region16: #{tpu_custom_call.1} parent=11 // pred_fallthru
          _
        // Predicated region
        $region17: #{tpu_custom_call.1} parent=11 // pred_check
          %p205 = pneg %p75
        $region18: #{tpu_custom_call.1} parent=11 // pred_check_branch
          %207 = sbr.rel (%p205) target = $region20
        $region19: #{tpu_custom_call.1} parent=11 // pred_region
          %209 = vsyncadd [#allocation6], 0
          %s210 = sshll.u32 %s1, 4
          %s211 = int_to_ptr.hbm [resolvable:$true] %s210
          %s212 = sshll.u32 [#allocation5], 4
          %s213 = int_to_ptr.vmem [resolvable:$true] %s212
          %218 = dma.hbm_to_vmem [thread:$0]  %s211, 512, %s213, [#allocation6], 128, 128, 8
        $region20: #{tpu_custom_call.1} parent=11 // pred_fallthru
          _
        // Predicated region
        $region21: #{tpu_custom_call.1} parent=11 // pred_check
          %p219 = pneg %p96
        $region22: #{tpu_custom_call.1} parent=11 // pred_check_branch
          %221 = sbr.rel (%p219) target = $region24
        $region23: #{tpu_custom_call.1} parent=11 // pred_region
          _
        $region24: #{tpu_custom_call.1} parent=11 // pred_fallthru
          _
      $region12: #{tpu_custom_call.1} parent=5 // pred_fallthru
        _
      %p222 = scmp.lt.s32.totalorder %s16, 2
      // Predicated region
      $region25: #{tpu_custom_call.1} parent=5 // pred_check
        %p223 = pneg %p222
      $region26: #{tpu_custom_call.1} parent=5 // pred_check_branch
        %225 = sbr.rel (%p223) target = $region28
      $region27: #{tpu_custom_call.1} parent=5 // pred_region
        // Predicated region
        $region29: #{tpu_custom_call.1} parent=27 // pred_check
          %p226 = pneg %p116
        $region30: #{tpu_custom_call.1} parent=27 // pred_check_branch
          %228 = sbr.rel (%p226) target = $region32
        $region31: #{tpu_custom_call.1} parent=27 // pred_region
          %s229 = sand.u32 %s16, 1
          %s230 = scalar_lea.sflag [#allocation3], %s229
          %s231 = sand.u32 %s106, 1
          %s232 = smul.addr %s231, 128
          %s233 = scalar_lea.vmem [#allocation7], %s232
          %235 = vsyncadd %s230, 0
          %s236 = smul.addr %s24, 8
          %s237 = scalar_lea.hbm %s3, %s236
          %s238 = sshll.u32 %s237, 4
          %s239 = int_to_ptr.hbm [resolvable:$true] %s238
          %s240 = sshll.u32 %s233, 4
          %s241 = int_to_ptr.vmem [resolvable:$true] %s240
          %246 = dma.hbm_to_vmem [thread:$0]  %s239, 2048, %s241, %s230, 256, 128, 8
        $region32: #{tpu_custom_call.1} parent=27 // pred_fallthru
          _
        // Predicated region
        $region33: #{tpu_custom_call.1} parent=27 // pred_check
          %p247 = pneg %p142
        $region34: #{tpu_custom_call.1} parent=27 // pred_check_branch
          %249 = sbr.rel (%p247) target = $region36
        $region35: #{tpu_custom_call.1} parent=27 // pred_region
          %p250 = scmp.lt.s32.totalorder %s24, 1
          %s251 = scalar_select %p250, %s24, 1
          %s252 = scalar_lea.vmem %s4, %s251
        $region36: #{tpu_custom_call.1} parent=27 // pred_fallthru
          _
      $region28: #{tpu_custom_call.1} parent=5 // pred_fallthru
        _
      %p253 = scmp.le.s32.totalorder 1, %s16
      %p254 = scmp.lt.s32.totalorder %s16, 3
      %p255 = pnand %p253, %p254
      %p256 = pneg %p255
      // Predicated region
      $region37: #{tpu_custom_call.1} parent=5 // pred_check
        _
      $region38: #{tpu_custom_call.1} parent=5 // pred_check_branch
        %258 = sbr.rel (%p255) target = $region40
      $region39: #{tpu_custom_call.1} parent=5 // pred_region
        %s259 = ssub.s32 %s16, 1
        // Predicated region
        $region41: #{tpu_custom_call.1} parent=39 // pred_check
          %p260 = pneg %p54
        $region42: #{tpu_custom_call.1} parent=39 // pred_check_branch
          %262 = sbr.rel (%p260) target = $region44
        $region43: #{tpu_custom_call.1} parent=39 // pred_region
          %264 = dma.done [#allocation3], 128
        $region44: #{tpu_custom_call.1} parent=39 // pred_fallthru
          _
        // Predicated region
        $region45: #{tpu_custom_call.1} parent=39 // pred_check
          %p265 = pneg %p75
        $region46: #{tpu_custom_call.1} parent=39 // pred_check_branch
          %267 = sbr.rel (%p265) target = $region48
        $region47: #{tpu_custom_call.1} parent=39 // pred_region
          %269 = dma.done [#allocation6], 512
        $region48: #{tpu_custom_call.1} parent=39 // pred_fallthru
          _
        %s270 = sand.u32 %s21, 1
        %s271 = scalar_lea.sflag [#allocation3], %s270
        %s272 = sand.u32 %s109, 1
        %s273 = smul.addr %s272, 128
        %s274 = scalar_lea.vmem [#allocation7], %s273
        // Predicated region
        $region49: #{tpu_custom_call.1} parent=39 // pred_check
          %p275 = pneg %p122
        $region50: #{tpu_custom_call.1} parent=39 // pred_check_branch
          %277 = sbr.rel (%p275) target = $region52
        $region51: #{tpu_custom_call.1} parent=39 // pred_region
          %279 = dma.done %s271, 2048
        $region52: #{tpu_custom_call.1} parent=39 // pred_fallthru
          _
        %p280 = pneg %p54
        %p281 = pneg %p51
        %p282 = pneg %p75
        %p283 = pneg %p72
        %p284 = pneg %p96
        %p285 = pneg %p93
        %s286 = sand.u32 %s21, 1
        %s287 = scalar_lea.sflag [#allocation3], %s286
        %s288 = sand.u32 %s109, 1
        %s289 = smul.addr %s288, 128
        %s290 = scalar_lea.vmem [#allocation7], %s289
        %p291 = pneg %p122
        %p292 = pneg %p119
        %p293 = scmp.lt.s32.totalorder %s26, 1
        %s294 = scalar_select %p293, %s26, 1
        %s295 = scalar_lea.vmem %s4, %s294
        %p296 = pneg %p148
        %p297 = pneg %p145
        %p298 = pneg %p176
        %p299 = pneg %p173
        %s300 = sand.u32 %s163, 1
        %s301 = scalar_lea.sflag [#allocation4], %s300
        %s302 = sand.u32 %s163, 1
        %s303 = smul.addr %s302, 8
        %s304 = scalar_lea.vmem [#allocation8], %s303
        %p305 = scmp.lt.s32.totalorder %s26, 1
        %s306 = scalar_select %p305, %s26, 1
        %s307 = scalar_lea.vmem %s4, %s306
        %v308 = vld [vmem:[#allocation2] sm:$0xff]
        %v309 = vld [vmem:[#allocation5] sm:$0xff]
        %v310 = vld [vmem:[#allocation5 + $0x8] sm:$0xff]
        %v311 = vld [vmem:[#allocation5 + $0x10] sm:$0xff]
        %v312 = vld [vmem:[#allocation5 + $0x18] sm:$0xff]
        %v313 = vld [vmem:[%s2] sm:$0x1]
        %v315 = vperm.slane %v313, 0
        %vm317 = vcmask 261120
        %v319 = vsel %vm317, %v308, 0
        %321 = vmatpush.msra.mxu0 0.0
        %322 = vmatpush.msra.mxu0 0.0
        %323 = vmatpush.msra.mxu0 0.0
        %324 = vmatpush.msra.mxu0 0.0
        %325 = vmatpush.msra.mxu0 0.0
        %326 = vmatpush.msra.mxu0 0.0
        %327 = vmatpush.msra.mxu0 0.0
        %328 = vmatpush.msra.mxu0 0.0
        %329 = vmatpush.msra.mxu0 0.0
        %330 = vmatpush.msra.mxu0 0.0
        %331 = vmatpush.msra.mxu0 0.0
        %332 = vmatpush.msra.mxu0 0.0
        %333 = vmatpush.msra.mxu0 %v312
        %334 = vmatpush.msra.mxu0 %v311
        %335 = vmatpush.msra.mxu0 %v310
        %336 = vmatpush.msra.mxu0 %v309
        %337 = vmatmul.f32.gmra.mxu0 %v319
        %v338 = vpop.f32.mrf.mxu0
        %v339 = vadd.f32 %v315, %v338
        %340 = vdwg.mxu0
        %v341 = vld [vmem:[%s274] sm:$0xff]
        %v342 = vld [vmem:[%s274 + $0x8] sm:$0xff]
        %v343 = vld [vmem:[%s274 + $0x10] sm:$0xff]
        %v344 = vld [vmem:[%s274 + $0x18] sm:$0xff]
        %v345 = vld [vmem:[%s274 + $0x20] sm:$0xff]
        %v346 = vld [vmem:[%s274 + $0x28] sm:$0xff]
        %v347 = vld [vmem:[%s274 + $0x30] sm:$0xff]
        %v348 = vld [vmem:[%s274 + $0x38] sm:$0xff]
        %v349 = vld [vmem:[%s274 + $0x40] sm:$0xff]
        %v350 = vld [vmem:[%s274 + $0x48] sm:$0xff]
        %v351 = vld [vmem:[%s274 + $0x50] sm:$0xff]
        %v352 = vld [vmem:[%s274 + $0x58] sm:$0xff]
        %v353 = vld [vmem:[%s274 + $0x60] sm:$0xff]
        %v354 = vld [vmem:[%s274 + $0x68] sm:$0xff]
        %v355 = vld [vmem:[%s274 + $0x70] sm:$0xff]
        %v356 = vld [vmem:[%s274 + $0x78] sm:$0xff]
        %v357 = vld [vmem:[%s307] sm:$0x1]
        %v359 = vperm.slane %v357, 0
        %361 = vmatpush.msra.mxu0 %v356
        %362 = vmatpush.msra.mxu0 %v355
        %363 = vmatpush.msra.mxu0 %v354
        %364 = vmatpush.msra.mxu0 %v353
        %365 = vmatpush.msra.mxu0 %v352
        %366 = vmatpush.msra.mxu0 %v351
        %367 = vmatpush.msra.mxu0 %v350
        %368 = vmatpush.msra.mxu0 %v349
        %369 = vmatpush.msra.mxu0 %v348
        %370 = vmatpush.msra.mxu0 %v347
        %371 = vmatpush.msra.mxu0 %v346
        %372 = vmatpush.msra.mxu0 %v345
        %373 = vmatpush.msra.mxu0 %v344
        %374 = vmatpush.msra.mxu0 %v343
        %375 = vmatpush.msra.mxu0 %v342
        %376 = vmatpush.msra.mxu0 %v341
        %377 = vmatmul.f32.gmra.mxu0 %v339
        %v378 = vpop.f32.mrf.mxu0
        %v379 = vadd.f32 %v359, %v378
        %380 = vdwg.mxu0
        %381 = vst [vmem:[%s304] sm:$0xff] %v379
        %s382 = sand.u32 %s163, 1
        %s383 = scalar_lea.sflag [#allocation4], %s382
        %s384 = sand.u32 %s163, 1
        %s385 = smul.addr %s384, 8
        %s386 = scalar_lea.vmem [#allocation8], %s385
        // Predicated region
        $region53: #{tpu_custom_call.1} parent=39 // pred_check
          %p387 = pneg %p173
        $region54: #{tpu_custom_call.1} parent=39 // pred_check_branch
          %389 = sbr.rel (%p387) target = $region56
        $region55: #{tpu_custom_call.1} parent=39 // pred_region
          %391 = vsyncadd %s383, 0
          %s392 = smul.addr %s25, 2
          %s393 = sadd.s32 %s26, %s392
          %s394 = smul.addr %s393, 8
          %s395 = scalar_lea.hbm %s5, %s394
          %s397 = sshll.u32 %s386, 4
          %s398 = int_to_ptr.vmem [resolvable:$true] %s397
          %s399 = sshll.u32 %s395, 4
          %s400 = int_to_ptr.hbm [resolvable:$true] %s399
          %402 = dma.vmem_to_hbm [thread:$0]  %s398, 128, %s400, %s383
        $region56: #{tpu_custom_call.1} parent=39 // pred_fallthru
          _
      $region40: #{tpu_custom_call.1} parent=5 // pred_fallthru
        _
      %p403 = scmp.le.s32.totalorder 2, %s16
      // Predicated region
      $region57: #{tpu_custom_call.1} parent=5 // pred_check
        %p404 = pneg %p403
      $region58: #{tpu_custom_call.1} parent=5 // pred_check_branch
        %406 = sbr.rel (%p404) target = $region60
      $region59: #{tpu_custom_call.1} parent=5 // pred_region
        %s407 = ssub.s32 %s16, 2
        // Predicated region
        $region61: #{tpu_custom_call.1} parent=59 // pred_check
          %p408 = pneg %p179
        $region62: #{tpu_custom_call.1} parent=59 // pred_check_branch
          %410 = sbr.rel (%p408) target = $region64
        $region63: #{tpu_custom_call.1} parent=59 // pred_region
          %s411 = sand.u32 %s164, 1
          %s412 = scalar_lea.sflag [#allocation4], %s411
          %s413 = sand.u32 %s164, 1
          %s414 = smul.addr %s413, 8
          %s415 = scalar_lea.vmem [#allocation8], %s414
          %417 = dma.done %s412, 128
        $region64: #{tpu_custom_call.1} parent=59 // pred_fallthru
          _
      $region60: #{tpu_custom_call.1} parent=5 // pred_fallthru
        _
    $region6: #{tpu_custom_call.1} parent=1 // loop_footer
      %s20 = sadd.s32 1, %s16
    $region7: #{tpu_custom_call.1} parent=1 // loop_footer_branch
      %15 = sbr.rel target = $region3
    $region8: #{tpu_custom_call.1} parent=1 // loop_exit
      _
    %418 = vsyncpa [#allocation3], 1
    %s419 = scalar_lea.sflag [#allocation3], 1
    %420 = vsyncpa %s419, 1
    %421 = vsyncpa [#allocation6], 1
    %422 = vsyncpa [#allocation4], 1
    %s423 = scalar_lea.sflag [#allocation4], 1
    %424 = vsyncpa %s423, 1

// kernel: tpu_custom_call.1
$region0: #{tpu_custom_call.1}
  #allocation0 [shape = 'u32[]', space=smem, size = 0x4, offset = 0x4, fixed_abs, tag = 'smem constant byte address 0x4 - core index']
  #allocation1 [shape = 'u32[72,128]{1,0:T(1,128)}', space=vmem, size = 0x9000, scoped, tag = 'internal scratch']
  %s0 = inlined_call_operand.hbm [shape: f32[8,32], index: 0, kind: input, shape index: {}]
  %s1 = inlined_call_operand.hbm [shape: f32[32,128], index: 1, kind: input, shape index: {}]
  %s2 = inlined_call_operand.vmem [shape: f32[1,128], index: 2, kind: input, shape index: {}]
  %s3 = inlined_call_operand.hbm [shape: f32[128,256], index: 3, kind: input, shape index: {}]
  %s4 = inlined_call_operand.vmem [shape: f32[1,256], index: 4, kind: input, shape index: {}]
  %s5 = inlined_call_operand.hbm [shape: f32[8,256], index: 5, kind: output, shape index: {}]
  %s6 = sld [smem:[#allocation0]]
  $region65: #{tpu_custom_call.1} parent=0
    _
  %s8 = ssub.s32 1, %s6
  %s9 = scalar_select 0, %s8, %s6
  $region1: #{tpu_custom_call.1} parent=0
    #allocation2 [shape = 'u8[4096]{0}', space=vmem, size = 0x1000, scoped, tag = 'input window, operand 0, single buffered']
    #allocation3 [shape = 's32[2]{0}', space=sflag, size = 0x8, scoped, tag = 'scoped memory for tpu_custom_call.1']
    #allocation4 [shape = 's32[2]{0}', space=sflag, size = 0x8, scoped, tag = 'scoped memory for tpu_custom_call.1']
    #allocation5 [shape = 'u8[16384]{0}', space=vmem, size = 0x4000, scoped, tag = 'input window, operand 1, single buffered']
    #allocation6 [shape = 's32[1]{0}', space=sflag, size = 0x4, scoped, tag = 'scoped memory for tpu_custom_call.1']
    #allocation7 [shape = 'u8[131072]{0}', space=vmem, size = 0x20000, scoped, tag = 'input window, operand 3']
    #allocation8 [shape = 'u8[8192]{0}', space=vmem, size = 0x2000, scoped, tag = 'output window, operand 0']
    %10 = vsyncpa [#allocation3], 0
    %11 = vsyncpa [#allocation6], 0
    %12 = vsyncpa [#allocation4], 0
    %s13 = scalar_lea.sflag [#allocation4], 1
    %14 = vsyncpa %s13, 0
    loop: start=0, step=1, limit=4
    $region2: #{tpu_custom_call.1} parent=1 // loop_pre_header
      _
    $region3: #{tpu_custom_call.1} parent=1 // loop_header
      %s16 = sphi 0, %s20
      %p17 = scmp.ge.s32.totalorder %s16, 4
      %s23 = sphi 0, %s35
      %s24 = sphi 0, %s31
      %s25 = sphi 0, %s23
      %s26 = sphi 0, %s24
      %s27 = sphi 0, %s25
      %s28 = sphi 0, %s26
      %s38 = sphi 0, %s40
      %s41 = sphi 0, %s38
      %s42 = sphi 0, %s41
      %s58 = sphi 0, %s42
      %s62 = sphi 0, %s62
      %s64 = sphi 0, %s62
      %s65 = sphi 0, %s64
      %s79 = sphi 0, %s65
      %s83 = sphi 0, %s83
      %s85 = sphi 0, %s83
      %s86 = sphi 0, %s85
      %s100 = sphi 0, %s86
      %s106 = sphi 0, %s108
      %s109 = sphi 0, %s106
      %s110 = sphi 0, %s109
      %s126 = sphi 0, %s110
      %s132 = sphi 0, %s134
      %s135 = sphi 0, %s132
      %s136 = sphi 0, %s135
      %s152 = sphi 0, %s136
      %s160 = sphi 0, %s162
      %s163 = sphi 0, %s160
      %s164 = sphi 0, %s163
      %s180 = sphi 0, %s164
    $region4: #{tpu_custom_call.1} parent=1 // loop_header_branch
      %19 = sbr.rel (%p17) target = $region8
    $region5: #{tpu_custom_call.1} parent=1 // loop_body
      %s21 = ssub.s32 %s16, 1
      %s22 = ssub.s32 %s16, 2
      %s29 = sadd.s32 1, %s24
      %p30 = scmp.ge.s32.totalorder %s29, 2
      %s31 = scalar_select %p30, 0, %s29
      %s32 = sadd.s32 1, %s23
      %s33 = scalar_select %p30, %s32, %s23
      %p34 = scmp.ge.s32.totalorder %s33, 1
      %s35 = scalar_select %p34, 0, %s33
      %s36 = ssub.s32 %s23, %s35
      %p37 = scmp.eq.s32.totalorder %s36, 0
      %s39 = sadd.s32 %s38, 1
      %s40 = scalar_select %p37, %s38, %s39
      %p43 = pneg %p37
      %p44 = scmp.eq.s32.totalorder %s16, 1
      %p45 = por %p43, %p44
      %p46 = scmp.ne.s32.totalorder %s38, %s41
      %p47 = scmp.eq.s32.totalorder %s16, 0
      %p48 = por %p46, %p47
      %p49 = scmp.ne.s32.totalorder %s38, %s41
      %p50 = scmp.eq.s32.totalorder %s21, 1
      %p51 = por %p49, %p50
      %p52 = scmp.ne.s32.totalorder %s41, %s42
      %p53 = scmp.eq.s32.totalorder %s21, 0
      %p54 = por %p52, %p53
      %p55 = scmp.ne.s32.totalorder %s41, %s42
      %p56 = scmp.eq.s32.totalorder %s22, 1
      %p57 = por %p55, %p56
      %p59 = scmp.ne.s32.totalorder %s42, %s58
      %p60 = scmp.eq.s32.totalorder %s22, 0
      %p61 = por %p59, %p60
      %s63 = sadd.s32 %s62, 1
      %p66 = scmp.eq.s32.totalorder %s16, 1
      %p67 = scmp.ne.s32.totalorder %s62, %s64
      %p68 = scmp.eq.s32.totalorder %s16, 0
      %p69 = por %p67, %p68
      %p70 = scmp.ne.s32.totalorder %s62, %s64
      %p71 = scmp.eq.s32.totalorder %s21, 1
      %p72 = por %p70, %p71
      %p73 = scmp.ne.s32.totalorder %s64, %s65
      %p74 = scmp.eq.s32.totalorder %s21, 0
      %p75 = por %p73, %p74
      %p76 = scmp.ne.s32.totalorder %s64, %s65
      %p77 = scmp.eq.s32.totalorder %s22, 1
      %p78 = por %p76, %p77
      %p80 = scmp.ne.s32.totalorder %s65, %s79
      %p81 = scmp.eq.s32.totalorder %s22, 0
      %p82 = por %p80, %p81
      %s84 = sadd.s32 %s83, 1
      %p87 = scmp.eq.s32.totalorder %s16, 1
      %p88 = scmp.ne.s32.totalorder %s83, %s85
      %p89 = scmp.eq.s32.totalorder %s16, 0
      %p90 = por %p88, %p89
      %p91 = scmp.ne.s32.totalorder %s83, %s85
      %p92 = scmp.eq.s32.totalorder %s21, 1
      %p93 = por %p91, %p92
      %p94 = scmp.ne.s32.totalorder %s85, %s86
      %p95 = scmp.eq.s32.totalorder %s21, 0
      %p96 = por %p94, %p95
      %p97 = scmp.ne.s32.totalorder %s85, %s86
      %p98 = scmp.eq.s32.totalorder %s22, 1
      %p99 = por %p97, %p98
      %p101 = scmp.ne.s32.totalorder %s86, %s100
      %p102 = scmp.eq.s32.totalorder %s22, 0
      %p103 = por %p101, %p102
      %s104 = ssub.s32 %s24, %s31
      %p105 = scmp.eq.s32.totalorder %s104, 0
      %s107 = sadd.s32 %s106, 1
      %s108 = scalar_select %p105, %s106, %s107
      %p111 = pneg %p105
      %p112 = scmp.eq.s32.totalorder %s16, 1
      %p113 = por %p111, %p112
      %p114 = scmp.ne.s32.totalorder %s106, %s109
      %p115 = scmp.eq.s32.totalorder %s16, 0
      %p116 = por %p114, %p115
      %p117 = scmp.ne.s32.totalorder %s106, %s109
      %p118 = scmp.eq.s32.totalorder %s21, 1
      %p119 = por %p117, %p118
      %p120 = scmp.ne.s32.totalorder %s109, %s110
      %p121 = scmp.eq.s32.totalorder %s21, 0
      %p122 = por %p120, %p121
      %p123 = scmp.ne.s32.totalorder %s109, %s110
      %p124 = scmp.eq.s32.totalorder %s22, 1
      %p125 = por %p123, %p124
      %p127 = scmp.ne.s32.totalorder %s110, %s126
      %p128 = scmp.eq.s32.totalorder %s22, 0
      %p129 = por %p127, %p128
      %s130 = ssub.s32 %s24, %s31
      %p131 = scmp.eq.s32.totalorder %s130, 0
      %s133 = sadd.s32 %s132, 1
      %s134 = scalar_select %p131, %s132, %s133
      %p137 = pneg %p131
      %p138 = scmp.eq.s32.totalorder %s16, 1
      %p139 = por %p137, %p138
      %p140 = scmp.ne.s32.totalorder %s132, %s135
      %p141 = scmp.eq.s32.totalorder %s16, 0
      %p142 = por %p140, %p141
      %p143 = scmp.ne.s32.totalorder %s132, %s135
      %p144 = scmp.eq.s32.totalorder %s21, 1
      %p145 = por %p143, %p144
      %p146 = scmp.ne.s32.totalorder %s135, %s136
      %p147 = scmp.eq.s32.totalorder %s21, 0
      %p148 = por %p146, %p147
      %p149 = scmp.ne.s32.totalorder %s135, %s136
      %p150 = scmp.eq.s32.totalorder %s22, 1
      %p151 = por %p149, %p150
      %p153 = scmp.ne.s32.totalorder %s136, %s152
      %p154 = scmp.eq.s32.totalorder %s22, 0
      %p155 = por %p153, %p154
      %s156 = ssub.s32 %s23, %s35
      %s157 = ssub.s32 %s24, %s31
      %s158 = sor.u32 %s156, %s157
      %p159 = scmp.eq.s32.totalorder %s158, 0
      %s161 = sadd.s32 %s160, 1
      %s162 = scalar_select %p159, %s160, %s161
      %p165 = pneg %p159
      %p166 = scmp.eq.s32.totalorder %s16, 1
      %p167 = por %p165, %p166
      %p168 = scmp.ne.s32.totalorder %s160, %s163
      %p169 = scmp.eq.s32.totalorder %s16, 0
      %p170 = por %p168, %p169
      %p171 = scmp.ne.s32.totalorder %s160, %s163
      %p172 = scmp.eq.s32.totalorder %s21, 1
      %p173 = por %p171, %p172
      %p174 = scmp.ne.s32.totalorder %s163, %s164
      %p175 = scmp.eq.s32.totalorder %s21, 0
      %p176 = por %p174, %p175
      %p177 = scmp.ne.s32.totalorder %s163, %s164
      %p178 = scmp.eq.s32.totalorder %s22, 1
      %p179 = por %p177, %p178
      %p181 = scmp.ne.s32.totalorder %s164, %s180
      %p182 = scmp.eq.s32.totalorder %s22, 0
      %p183 = por %p181, %p182
      %p184 = scmp.le.s32.totalorder 1, %s16
      %p185 = scmp.lt.s32.totalorder %s16, 3
      %p186 = pnand %p184, %p185
      %p187 = pneg %p186
      // Predicated region
      $region9: #{tpu_custom_call.1} parent=5 // pred_check
        _
      $region10: #{tpu_custom_call.1} parent=5 // pred_check_branch
        %189 = sbr.rel (%p186) target = $region12
      $region11: #{tpu_custom_call.1} parent=5 // pred_region
        %s190 = ssub.s32 %s16, 1
        // Predicated region
        $region13: #{tpu_custom_call.1} parent=11 // pred_check
          %p191 = pneg %p54
        $region14: #{tpu_custom_call.1} parent=11 // pred_check_branch
          %193 = sbr.rel (%p191) target = $region16
        $region15: #{tpu_custom_call.1} parent=11 // pred_region
          %195 = vsyncadd [#allocation3], 0
          %s196 = smul.addr %s25, 8
          %s197 = scalar_lea.hbm %s0, %s196
          %s199 = sshll.u32 %s197, 4
          %s200 = int_to_ptr.hbm [resolvable:$true] %s199
          %s201 = sshll.u32 [#allocation2], 4
          %s202 = int_to_ptr.vmem [resolvable:$true] %s201
          %204 = dma.hbm_to_vmem [thread:$0]  %s200, 128, %s202, [#allocation3]
        $region16: #{tpu_custom_call.1} parent=11 // pred_fallthru
          _
        // Predicated region
        $region17: #{tpu_custom_call.1} parent=11 // pred_check
          %p205 = pneg %p75
        $region18: #{tpu_custom_call.1} parent=11 // pred_check_branch
          %207 = sbr.rel (%p205) target = $region20
        $region19: #{tpu_custom_call.1} parent=11 // pred_region
          %209 = vsyncadd [#allocation6], 0
          %s210 = sshll.u32 %s1, 4
          %s211 = int_to_ptr.hbm [resolvable:$true] %s210
          %s212 = sshll.u32 [#allocation5], 4
          %s213 = int_to_ptr.vmem [resolvable:$true] %s212
          %218 = dma.hbm_to_vmem [thread:$0]  %s211, 512, %s213, [#allocation6], 128, 128, 8
        $region20: #{tpu_custom_call.1} parent=11 // pred_fallthru
          _
        // Predicated region
        $region21: #{tpu_custom_call.1} parent=11 // pred_check
          %p219 = pneg %p96
        $region22: #{tpu_custom_call.1} parent=11 // pred_check_branch
          %221 = sbr.rel (%p219) target = $region24
        $region23: #{tpu_custom_call.1} parent=11 // pred_region
          _
        $region24: #{tpu_custom_call.1} parent=11 // pred_fallthru
          _
      $region12: #{tpu_custom_call.1} parent=5 // pred_fallthru
        _
      %p222 = scmp.lt.s32.totalorder %s16, 2
      // Predicated region
      $region25: #{tpu_custom_call.1} parent=5 // pred_check
        %p223 = pneg %p222
      $region26: #{tpu_custom_call.1} parent=5 // pred_check_branch
        %225 = sbr.rel (%p223) target = $region28
      $region27: #{tpu_custom_call.1} parent=5 // pred_region
        // Predicated region
        $region29: #{tpu_custom_call.1} parent=27 // pred_check
          %p226 = pneg %p116
        $region30: #{tpu_custom_call.1} parent=27 // pred_check_branch
          %228 = sbr.rel (%p226) target = $region32
        $region31: #{tpu_custom_call.1} parent=27 // pred_region
          %s229 = sand.u32 %s16, 1
          %s230 = scalar_lea.sflag [#allocation3], %s229
          %s231 = sand.u32 %s106, 1
          %s232 = smul.addr %s231, 128
          %s233 = scalar_lea.vmem [#allocation7], %s232
          %235 = vsyncadd %s230, 0
          %s236 = smul.addr %s24, 8
          %s237 = scalar_lea.hbm %s3, %s236
          %s238 = sshll.u32 %s237, 4
          %s239 = int_to_ptr.hbm [resolvable:$true] %s238
          %s240 = sshll.u32 %s233, 4
          %s241 = int_to_ptr.vmem [resolvable:$true] %s240
          %246 = dma.hbm_to_vmem [thread:$0]  %s239, 2048, %s241, %s230, 256, 128, 8
        $region32: #{tpu_custom_call.1} parent=27 // pred_fallthru
          _
        // Predicated region
        $region33: #{tpu_custom_call.1} parent=27 // pred_check
          %p247 = pneg %p142
        $region34: #{tpu_custom_call.1} parent=27 // pred_check_branch
          %249 = sbr.rel (%p247) target = $region36
        $region35: #{tpu_custom_call.1} parent=27 // pred_region
          %p250 = scmp.lt.s32.totalorder %s24, 1
          %s251 = scalar_select %p250, %s24, 1
          %s252 = scalar_lea.vmem %s4, %s251
        $region36: #{tpu_custom_call.1} parent=27 // pred_fallthru
          _
      $region28: #{tpu_custom_call.1} parent=5 // pred_fallthru
        _
      %p253 = scmp.le.s32.totalorder 1, %s16
      %p254 = scmp.lt.s32.totalorder %s16, 3
      %p255 = pnand %p253, %p254
      %p256 = pneg %p255
      // Predicated region
      $region37: #{tpu_custom_call.1} parent=5 // pred_check
        _
      $region38: #{tpu_custom_call.1} parent=5 // pred_check_branch
        %258 = sbr.rel (%p255) target = $region40
      $region39: #{tpu_custom_call.1} parent=5 // pred_region
        %s259 = ssub.s32 %s16, 1
        // Predicated region
        $region41: #{tpu_custom_call.1} parent=39 // pred_check
          %p260 = pneg %p54
        $region42: #{tpu_custom_call.1} parent=39 // pred_check_branch
          %262 = sbr.rel (%p260) target = $region44
        $region43: #{tpu_custom_call.1} parent=39 // pred_region
          %264 = dma.done [#allocation3], 128
        $region44: #{tpu_custom_call.1} parent=39 // pred_fallthru
          _
        // Predicated region
        $region45: #{tpu_custom_call.1} parent=39 // pred_check
          %p265 = pneg %p75
        $region46: #{tpu_custom_call.1} parent=39 // pred_check_branch
          %267 = sbr.rel (%p265) target = $region48
        $region47: #{tpu_custom_call.1} parent=39 // pred_region
          %269 = dma.done [#allocation6], 512
        $region48: #{tpu_custom_call.1} parent=39 // pred_fallthru
          _
        %s270 = sand.u32 %s21, 1
        %s271 = scalar_lea.sflag [#allocation3], %s270
        %s272 = sand.u32 %s109, 1
        %s273 = smul.addr %s272, 128
        %s274 = scalar_lea.vmem [#allocation7], %s273
        // Predicated region
        $region49: #{tpu_custom_call.1} parent=39 // pred_check
          %p275 = pneg %p122
        $region50: #{tpu_custom_call.1} parent=39 // pred_check_branch
          %277 = sbr.rel (%p275) target = $region52
        $region51: #{tpu_custom_call.1} parent=39 // pred_region
          %279 = dma.done %s271, 2048
        $region52: #{tpu_custom_call.1} parent=39 // pred_fallthru
          _
        %p280 = pneg %p54
        %p281 = pneg %p51
        %p282 = pneg %p75
        %p283 = pneg %p72
        %p284 = pneg %p96
        %p285 = pneg %p93
        %s286 = sand.u32 %s21, 1
        %s287 = scalar_lea.sflag [#allocation3], %s286
        %s288 = sand.u32 %s109, 1
        %s289 = smul.addr %s288, 128
        %s290 = scalar_lea.vmem [#allocation7], %s289
        %p291 = pneg %p122
        %p292 = pneg %p119
        %p293 = scmp.lt.s32.totalorder %s26, 1
        %s294 = scalar_select %p293, %s26, 1
        %s295 = scalar_lea.vmem %s4, %s294
        %p296 = pneg %p148
        %p297 = pneg %p145
        %p298 = pneg %p176
        %p299 = pneg %p173
        %s300 = sand.u32 %s163, 1
        %s301 = scalar_lea.sflag [#allocation4], %s300
        %s302 = sand.u32 %s163, 1
        %s303 = smul.addr %s302, 8
        %s304 = scalar_lea.vmem [#allocation8], %s303
        %p305 = scmp.lt.s32.totalorder %s26, 1
        %s306 = scalar_select %p305, %s26, 1
        %s307 = scalar_lea.vmem %s4, %s306
        %v308 = vld [vmem:[#allocation2] sm:$0xff]
        %v309 = vld [vmem:[#allocation5] sm:$0xff]
        %v310 = vld [vmem:[#allocation5 + $0x8] sm:$0xff]
        %v311 = vld [vmem:[#allocation5 + $0x10] sm:$0xff]
        %v312 = vld [vmem:[#allocation5 + $0x18] sm:$0xff]
        %v313 = vld [vmem:[%s2] sm:$0x1]
        %v315 = vperm.slane %v313, 0
        %vm317 = vcmask 261120
        %v319 = vsel %vm317, %v308, 0
        %321 = vmatpush.msra.mxu0 0.0
        %322 = vmatpush.msra.mxu0 0.0
        %323 = vmatpush.msra.mxu0 0.0
        %324 = vmatpush.msra.mxu0 0.0
        %325 = vmatpush.msra.mxu0 0.0
        %326 = vmatpush.msra.mxu0 0.0
        %327 = vmatpush.msra.mxu0 0.0
        %328 = vmatpush.msra.mxu0 0.0
        %329 = vmatpush.msra.mxu0 0.0
        %330 = vmatpush.msra.mxu0 0.0
        %331 = vmatpush.msra.mxu0 0.0
        %332 = vmatpush.msra.mxu0 0.0
        %333 = vmatpush.msra.mxu0 %v312
        %334 = vmatpush.msra.mxu0 %v311
        %335 = vmatpush.msra.mxu0 %v310
        %336 = vmatpush.msra.mxu0 %v309
        %337 = vmatmul.f32.gmra.mxu0 %v319
        %v338 = vpop.f32.mrf.mxu0
        %v339 = vadd.f32 %v315, %v338
        %340 = vdwg.mxu0
        %v341 = vld [vmem:[%s274] sm:$0xff]
        %v342 = vld [vmem:[%s274 + $0x8] sm:$0xff]
        %v343 = vld [vmem:[%s274 + $0x10] sm:$0xff]
        %v344 = vld [vmem:[%s274 + $0x18] sm:$0xff]
        %v345 = vld [vmem:[%s274 + $0x20] sm:$0xff]
        %v346 = vld [vmem:[%s274 + $0x28] sm:$0xff]
        %v347 = vld [vmem:[%s274 + $0x30] sm:$0xff]
        %v348 = vld [vmem:[%s274 + $0x38] sm:$0xff]
        %v349 = vld [vmem:[%s274 + $0x40] sm:$0xff]
        %v350 = vld [vmem:[%s274 + $0x48] sm:$0xff]
        %v351 = vld [vmem:[%s274 + $0x50] sm:$0xff]
        %v352 = vld [vmem:[%s274 + $0x58] sm:$0xff]
        %v353 = vld [vmem:[%s274 + $0x60] sm:$0xff]
        %v354 = vld [vmem:[%s274 + $0x68] sm:$0xff]
        %v355 = vld [vmem:[%s274 + $0x70] sm:$0xff]
        %v356 = vld [vmem:[%s274 + $0x78] sm:$0xff]
        %v357 = vld [vmem:[%s307] sm:$0x1]
        %v359 = vperm.slane %v357, 0
        %361 = vmatpush.msra.mxu0 %v356
        %362 = vmatpush.msra.mxu0 %v355
        %363 = vmatpush.msra.mxu0 %v354
        %364 = vmatpush.msra.mxu0 %v353
        %365 = vmatpush.msra.mxu0 %v352
        %366 = vmatpush.msra.mxu0 %v351
        %367 = vmatpush.msra.mxu0 %v350
        %368 = vmatpush.msra.mxu0 %v349
        %369 = vmatpush.msra.mxu0 %v348
        %370 = vmatpush.msra.mxu0 %v347
        %371 = vmatpush.msra.mxu0 %v346
        %372 = vmatpush.msra.mxu0 %v345
        %373 = vmatpush.msra.mxu0 %v344
        %374 = vmatpush.msra.mxu0 %v343
        %375 = vmatpush.msra.mxu0 %v342
        %376 = vmatpush.msra.mxu0 %v341
        %377 = vmatmul.f32.gmra.mxu0 %v339
        %v378 = vpop.f32.mrf.mxu0
        %v379 = vadd.f32 %v359, %v378
        %380 = vdwg.mxu0
        %381 = vst [vmem:[%s304] sm:$0xff] %v379
        %s382 = sand.u32 %s163, 1
        %s383 = scalar_lea.sflag [#allocation4], %s382
        %s384 = sand.u32 %s163, 1
        %s385 = smul.addr %s384, 8
        %s386 = scalar_lea.vmem [#allocation8], %s385
        // Predicated region
        $region53: #{tpu_custom_call.1} parent=39 // pred_check
          %p387 = pneg %p173
        $region54: #{tpu_custom_call.1} parent=39 // pred_check_branch
          %389 = sbr.rel (%p387) target = $region56
        $region55: #{tpu_custom_call.1} parent=39 // pred_region
          %391 = vsyncadd %s383, 0
          %s392 = smul.addr %s25, 2
          %s393 = sadd.s32 %s26, %s392
          %s394 = smul.addr %s393, 8
          %s395 = scalar_lea.hbm %s5, %s394
          %s397 = sshll.u32 %s386, 4
          %s398 = int_to_ptr.vmem [resolvable:$true] %s397
          %s399 = sshll.u32 %s395, 4
          %s400 = int_to_ptr.hbm [resolvable:$true] %s399
          %402 = dma.vmem_to_hbm [thread:$0]  %s398, 128, %s400, %s383
        $region56: #{tpu_custom_call.1} parent=39 // pred_fallthru
          _
      $region40: #{tpu_custom_call.1} parent=5 // pred_fallthru
        _
      %p403 = scmp.le.s32.totalorder 2, %s16
      // Predicated region
      $region57: #{tpu_custom_call.1} parent=5 // pred_check
        %p404 = pneg %p403
      $region58: #{tpu_custom_call.1} parent=5 // pred_check_branch
        %406 = sbr.rel (%p404) target = $region60
      $region59: #{tpu_custom_call.1} parent=5 // pred_region
        %s407 = ssub.s32 %s16, 2
        // Predicated region
        $region61: #{tpu_custom_call.1} parent=59 // pred_check
          %p408 = pneg %p179
        $region62: #{tpu_custom_call.1} parent=59 // pred_check_branch
          %410 = sbr.rel (%p408) target = $region64
        $region63: #{tpu_custom_call.1} parent=59 // pred_region
          %s411 = sand.u32 %s164, 1
          %s412 = scalar_lea.sflag [#allocation4], %s411
          %s413 = sand.u32 %s164, 1
          %s414 = smul.addr %s413, 8
          %s415 = scalar_lea.vmem [#allocation8], %s414
          %417 = dma.done %s412, 128
        $region64: #{tpu_custom_call.1} parent=59 // pred_fallthru
          _
      $region60: #{tpu_custom_call.1} parent=5 // pred_fallthru
        _
    $region6: #{tpu_custom_call.1} parent=1 // loop_footer
      %s20 = sadd.s32 1, %s16
    $region7: #{tpu_custom_call.1} parent=1 // loop_footer_branch
      %15 = sbr.rel target = $region3
    $region8: #{tpu_custom_call.1} parent=1 // loop_exit
      _
    %418 = vsyncpa [#allocation3], 1
    %s419 = scalar_lea.sflag [#allocation3], 1
    %420 = vsyncpa %s419, 1
    %421 = vsyncpa [#allocation6], 1
    %422 = vsyncpa [#allocation4], 1
    %s423 = scalar_lea.sflag [#allocation4], 1
    %424 = vsyncpa %s423, 1

</llo_original>
